<compile_context>
chip_gen: v7x
topology: tpu7x:2x2x1
jax: 0.10.0
libtpu: 0.0.40
codegen_flags: <defaults>
</compile_context>

<pallas_src>
import jax
import jax.numpy as jnp
from jax import lax
from jax.experimental import pallas as pl
from jax.experimental.pallas import tpu as pltpu


# ----------------------------- model config --------------------------------
T = 16          # feat_length (encoder time steps)
EPROJS = 32     # encoder projection dim (enc_size)
DUNITS = 32     # decoder hidden units
ATT_DIM = 32    # attention MLP dim
DEMBED = 32     # embedding dim
ODIM = 64       # output vocab size (also embedding vocab)
DLAYERS = 2     # LSTM decoder layers


def _align8(n):
    return ((n + 7) // 8) * 8


# ---- packed-weight slab layout (row offsets, all sublane-8 aligned) --------
# slab "w128": lane width = 4*DUNITS
R_WIH0E = 0
R_WIH0C = R_WIH0E + DEMBED            # 32
R_WHH0 = R_WIH0C + EPROJS             # 64
R_WIH1 = R_WHH0 + DUNITS              # 96
R_WHH1 = R_WIH1 + DUNITS              # 128
R_B0 = _align8(R_WHH1 + DUNITS)       # 160  (bih0 + bhh0 folded)
R_B1 = R_B0 + 8                       # 168  (bih1 + bhh1 folded)
W128_ROWS = R_B1 + 8                  # 176

# slab "w64": lane width = ODIM
R_WOUT = 0
R_BOUT = _align8(DUNITS)              # 32
W64_ROWS = R_BOUT + 8                 # 40

# slab "w32": lane width = ATT_DIM (== DEMBED)
R_EMBED = 0
R_WDEC = _align8(ODIM)                # 64
R_GVEC = _align8(R_WDEC + DUNITS)     # 96
W32_ROWS = R_GVEC + 8                 # 104


# ------------------------------- kernel ------------------------------------
def rnn_decoder_kernel(vy_ref, state_ref, pceh_ref, ench_ref, mask_ref,
                       w128_ref, w64_ref, w32_ref,
                       logp_ref, state_out_ref, attw_ref):
    f32 = jnp.float32
    du = DUNITS

    # --- embedding lookup: ey = embed(vy), [1, DEMBED] (embed rows start at 0)
    tok = vy_ref[0]
    ey = w32_ref[pl.ds(tok, 1), :]

    # --- previous decoder states (packed [4, DUNITS]: z0, z1, c0, c1) ---
    z_prev0 = state_ref[pl.ds(0, 1), :]
    z_prev1 = state_ref[pl.ds(1, 1), :]
    c_prev0 = state_ref[pl.ds(2, 1), :]
    c_prev1 = state_ref[pl.ds(3, 1), :]

    # --- additive attention (AttAdd); att_prev unused. Row/lane-dense [1, T].
    wdec = w32_ref[pl.ds(R_WDEC, DUNITS), :]                        # [DUNITS, ATT_DIM]
    gvec = w32_ref[pl.ds(R_GVEC, 1), :]                             # [1, ATT_DIM]
    dproj = jnp.dot(z_prev0, wdec, preferred_element_type=f32)      # [1, ATT_DIM]
    et = jnp.tanh(pceh_ref[...] + dproj)                            # [T, ATT_DIM]
    # e[0, t] = sum_k gvec[0, k] * et[t, k]   (single MXU push, A @ B^T form)
    e = lax.dot_general(gvec, et, (((1,), (1,)), ((), ())),
                        preferred_element_type=f32)                 # [1, T]
    e = e + mask_ref[...]                                           # additive -inf mask
    e_max = jnp.max(e, axis=-1, keepdims=True)
    w_un = jnp.exp(e - e_max)
    w = w_un / jnp.sum(w_un, axis=-1, keepdims=True)                # [1, T] attention weights
    att_c = jnp.dot(w, ench_ref[...], preferred_element_type=f32)   # [1, EPROJS] via MXU

    # --- LSTM layer 0 : input = concat(ey, att_c) via split weights ---
    wih0_e = w128_ref[pl.ds(R_WIH0E, DEMBED), :]
    wih0_c = w128_ref[pl.ds(R_WIH0C, EPROJS), :]
    whh0 = w128_ref[pl.ds(R_WHH0, DUNITS), :]
    b0 = w128_ref[pl.ds(R_B0, 1), :]                                # bih0 + bhh0 folded
    gates0 = (jnp.dot(ey, wih0_e, preferred_element_type=f32)
              + jnp.dot(att_c, wih0_c, preferred_element_type=f32)
              + jnp.dot(z_prev0, whh0, preferred_element_type=f32)
              + b0)                                                 # [1, 4*du] (one vreg row)
    sg0 = jax.nn.sigmoid(gates0)                                    # full-width EUP pass
    th0 = jnp.tanh(gates0)                                          # full-width EUP pass
    c0 = sg0[:, du:2 * du] * c_prev0 + sg0[:, :du] * th0[:, 2 * du:3 * du]
    z0 = sg0[:, 3 * du:] * jnp.tanh(c0)

    # --- LSTM layer 1 ---
    wih1 = w128_ref[pl.ds(R_WIH1, DUNITS), :]
    whh1 = w128_ref[pl.ds(R_WHH1, DUNITS), :]
    b1 = w128_ref[pl.ds(R_B1, 1), :]                                # bih1 + bhh1 folded
    gates1 = (jnp.dot(z0, wih1, preferred_element_type=f32)
              + jnp.dot(z_prev1, whh1, preferred_element_type=f32)
              + b1)
    sg1 = jax.nn.sigmoid(gates1)
    th1 = jnp.tanh(gates1)
    c1 = sg1[:, du:2 * du] * c_prev1 + sg1[:, :du] * th1[:, 2 * du:3 * du]
    z1 = sg1[:, 3 * du:] * jnp.tanh(c1)

    # --- output projection + log_softmax over vocab ---
    wout = w64_ref[pl.ds(R_WOUT, DUNITS), :]
    bout = w64_ref[pl.ds(R_BOUT, 1), :]
    logits = jnp.dot(z1, wout, preferred_element_type=f32) + bout   # [1, ODIM]
    lmax = jnp.max(logits, axis=-1, keepdims=True)
    shifted = logits - lmax
    lse = jnp.log(jnp.sum(jnp.exp(shifted), axis=-1, keepdims=True))

    logp_ref[...] = shifted - lse
    attw_ref[...] = w
    state_out_ref[pl.ds(0, 1), :] = z0
    state_out_ref[pl.ds(1, 1), :] = z1
    state_out_ref[pl.ds(2, 1), :] = c0
    state_out_ref[pl.ds(3, 1), :] = c1


# --------------------------- parameter packing ------------------------------
def pack_params(params):
    """One-time offline packing of all weights into 3 lane-aligned slabs."""
    w128 = jnp.zeros((W128_ROWS, 4 * DUNITS), jnp.float32)
    w128 = w128.at[R_WIH0E:R_WIH0E + DEMBED].set(params["wih0_e"])
    w128 = w128.at[R_WIH0C:R_WIH0C + EPROJS].set(params["wih0_c"])
    w128 = w128.at[R_WHH0:R_WHH0 + DUNITS].set(params["whh0"])
    w128 = w128.at[R_WIH1:R_WIH1 + DUNITS].set(params["wih1"])
    w128 = w128.at[R_WHH1:R_WHH1 + DUNITS].set(params["whh1"])
    w128 = w128.at[R_B0:R_B0 + 1].set(params["bih0"] + params["bhh0"])
    w128 = w128.at[R_B1:R_B1 + 1].set(params["bih1"] + params["bhh1"])

    w64 = jnp.zeros((W64_ROWS, ODIM), jnp.float32)
    w64 = w64.at[R_WOUT:R_WOUT + DUNITS].set(params["wout"])
    w64 = w64.at[R_BOUT:R_BOUT + 1].set(params["bout"])

    w32 = jnp.zeros((W32_ROWS, ATT_DIM), jnp.float32)
    w32 = w32.at[R_EMBED:R_EMBED + ODIM].set(params["embed"])
    w32 = w32.at[R_WDEC:R_WDEC + DUNITS].set(params["wdec"])
    w32 = w32.at[R_GVEC:R_GVEC + 1].set(params["gvec"])

    return {"w128": w128, "w64": w64, "w32": w32}


# ------------------------------- wrapper ------------------------------------
def rnn_decoder_forward(vy, packed, z_prev, c_prev, a_prev, pre_compute_enc_h,
                        enc_h, mask):
    """Mirrors RNNDecoder.forward (num_encs=1, context_residual=False).

    vy: int32 [1]; z_prev/c_prev: lists of [1, DUNITS]; a_prev: [1, T] (unused
    by AttAdd); pre_compute_enc_h: [1, T, ATT_DIM]; enc_h: [1, T, EPROJS];
    mask: [1, T] additive (-inf / 0) mask.  `packed` = pack_params(params).
    Returns (logp [ODIM], c_list, z_list, att_w [1, T]).
    """
    del a_prev  # AttAdd ignores previous attention weights
    pceh = pre_compute_enc_h[0]            # [T, ATT_DIM]
    ench = enc_h[0]                        # [T, EPROJS]
    state_in = jnp.concatenate(
        [z_prev[0], z_prev[1], c_prev[0], c_prev[1]], axis=0)  # [4, DUNITS]

    vmem = pl.BlockSpec(memory_space=pltpu.MemorySpace.VMEM)
    smem = pl.BlockSpec(memory_space=pltpu.MemorySpace.SMEM)

    out_shape = (
        jax.ShapeDtypeStruct((1, ODIM), jnp.float32),    # logp
        jax.ShapeDtypeStruct((4, DUNITS), jnp.float32),  # packed z0,z1,c0,c1
        jax.ShapeDtypeStruct((1, T), jnp.float32),       # att_w (lane-dense)
    )

    logp2d, state_out, att_w = pl.pallas_call(
        rnn_decoder_kernel,
        out_shape=out_shape,
        in_specs=[smem, vmem, vmem, vmem, vmem, vmem, vmem, vmem],
        out_specs=(vmem, vmem, vmem),
    )(vy, state_in, pceh, ench, mask,
      packed["w128"], packed["w64"], packed["w32"])

    logp = logp2d[0]                       # squeeze(0) -> [ODIM]
    z_list = [state_out[0:1], state_out[1:2]]
    c_list = [state_out[2:3], state_out[3:4]]
    return logp, c_list, z_list, att_w


# --------------------------- pure-JAX reference ------------------------------
def reference_forward(vy, params, z_prev, c_prev, a_prev, pceh, enc_h, mask):
    del a_prev
    ey = params["embed"][vy[0]][None, :]
    dproj = z_prev[0] @ params["wdec"]
    et = jnp.tanh(pceh[0] + dproj)
    e = jnp.sum(et * params["gvec"], axis=-1)[None, :] + mask          # [1, T]
    w = jax.nn.softmax(e, axis=1)
    att_c = jnp.sum(enc_h[0] * w[0][:, None], axis=0, keepdims=True)   # [1, EPROJS]

    def lstm(x, h, c, wih, bih, whh, bhh):
        g = x @ wih + bih + h @ whh + bhh
        du = h.shape[1]
        i = jax.nn.sigmoid(g[:, 0 * du:1 * du])
        f = jax.nn.sigmoid(g[:, 1 * du:2 * du])
        gg = jnp.tanh(g[:, 2 * du:3 * du])
        o = jax.nn.sigmoid(g[:, 3 * du:4 * du])
        cn = f * c + i * gg
        return o * jnp.tanh(cn), cn

    wih0 = jnp.concatenate([params["wih0_e"], params["wih0_c"]], axis=0)
    x0 = jnp.concatenate([ey, att_c], axis=1)
    z0, c0 = lstm(x0, z_prev[0], c_prev[0], wih0, params["bih0"],
                  params["whh0"], params["bhh0"])
    z1, c1 = lstm(z0, z_prev[1], c_prev[1], params["wih1"], params["bih1"],
                  params["whh1"], params["bhh1"])
    logits = z1 @ params["wout"] + params["bout"]
    logp = jax.nn.log_softmax(logits, axis=1)[0]
    return logp, [c0, c1], [z0, z1], w


# --------------------------------- main --------------------------------------
if __name__ == "__main__":
    key = jax.random.PRNGKey(0)
    ks = jax.random.split(key, 32)

    def rnd(k, shape, scale=0.1):
        return (scale * jax.random.normal(k, shape)).astype(jnp.float32)

    params = {
        "embed": rnd(ks[0], (ODIM, DEMBED)),
        # attention (AttAdd): mlp_dec (no bias) and gvec (Linear(att_dim, 1))
        "wdec": rnd(ks[1], (DUNITS, ATT_DIM)),
        "gvec": rnd(ks[2], (1, ATT_DIM)),
        # LSTM layer 0: input = concat(ey, att_c) -> split weight
        "wih0_e": rnd(ks[3], (DEMBED, 4 * DUNITS)),
        "wih0_c": rnd(ks[4], (EPROJS, 4 * DUNITS)),
        "bih0": rnd(ks[5], (1, 4 * DUNITS)),
        "whh0": rnd(ks[6], (DUNITS, 4 * DUNITS)),
        "bhh0": rnd(ks[7], (1, 4 * DUNITS)),
        # LSTM layer 1
        "wih1": rnd(ks[8], (DUNITS, 4 * DUNITS)),
        "bih1": rnd(ks[9], (1, 4 * DUNITS)),
        "whh1": rnd(ks[10], (DUNITS, 4 * DUNITS)),
        "bhh1": rnd(ks[11], (1, 4 * DUNITS)),
        # output projection
        "wout": rnd(ks[12], (DUNITS, ODIM)),
        "bout": rnd(ks[13], (1, ODIM)),
    }
    packed = pack_params(params)   # one-time offline slab packing

    # dummy inputs (mirrors get_dummy_inputs with small shapes)
    vy = jnp.array([1], dtype=jnp.int32)
    z_prev = [rnd(ks[14], (1, DUNITS), 1.0), rnd(ks[15], (1, DUNITS), 1.0)]
    c_prev = [rnd(ks[16], (1, DUNITS), 1.0), rnd(ks[17], (1, DUNITS), 1.0)]
    a_prev = rnd(ks[18], (1, T), 1.0)                      # unused by AttAdd
    pre_compute_enc_h = rnd(ks[19], (1, T, ATT_DIM), 1.0)
    enc_h = rnd(ks[20], (1, T, EPROJS), 1.0)
    mask = jnp.zeros((1, T), dtype=jnp.float32)            # no padding -> all zeros

    logp, c_list, z_list, att_w = rnn_decoder_forward(
        vy, packed, z_prev, c_prev, a_prev, pre_compute_enc_h, enc_h, mask)
    jax.block_until_ready((logp, c_list, z_list, att_w))

    # correctness check against a pure-JAX reference
    r_logp, r_c, r_z, r_w = reference_forward(
        vy, params, z_prev, c_prev, a_prev, pre_compute_enc_h, enc_h, mask)
    assert jnp.allclose(logp, r_logp, atol=2e-3, rtol=2e-3)
    assert jnp.allclose(att_w, r_w, atol=2e-3, rtol=2e-3)
    for a, b in zip(c_list + z_list, r_c + r_z):
        assert jnp.allclose(a, b, atol=2e-3, rtol=2e-3)
    assert logp.shape == (ODIM,) and att_w.shape == (1, T)

    print("KERNEL_OK")
</pallas_src>

<mosaic_0001>
module attributes {stable_mosaic.version = 11 : i64} {
  func.func @rnn_decoder_kernel(%arg0: memref<1xi32, #tpu.memory_space<smem>>, %arg1: memref<4x32xf32, #tpu.memory_space<vmem>>, %arg2: memref<16x32xf32, #tpu.memory_space<vmem>>, %arg3: memref<16x32xf32, #tpu.memory_space<vmem>>, %arg4: memref<1x16xf32, #tpu.memory_space<vmem>>, %arg5: memref<176x128xf32, #tpu.memory_space<vmem>>, %arg6: memref<40x64xf32, #tpu.memory_space<vmem>>, %arg7: memref<104x32xf32, #tpu.memory_space<vmem>>, %arg8: memref<1x64xf32, #tpu.memory_space<vmem>>, %arg9: memref<4x32xf32, #tpu.memory_space<vmem>>, %arg10: memref<1x16xf32, #tpu.memory_space<vmem>>) attributes {dimension_semantics = [], scalar_prefetch = 0 : i64, scratch_operands = 0 : i64, tpu.core_type = #tpu.core_type<tc>} {
    %c0 = arith.constant 0 : index
    %0 = memref.load %arg0[%c0] : memref<1xi32, #tpu.memory_space<smem>>
    %1 = arith.index_cast %0 : i32 to index
    %c0_0 = arith.constant 0 : index
    %2 = vector.load %arg7[%1, %c0_0] : memref<104x32xf32, #tpu.memory_space<vmem>>, vector<1x32xf32>
    %c0_1 = arith.constant 0 : index
    %c0_2 = arith.constant 0 : index
    %3 = vector.load %arg1[%c0_1, %c0_2] : memref<4x32xf32, #tpu.memory_space<vmem>>, vector<1x32xf32>
    %c1 = arith.constant 1 : index
    %c0_3 = arith.constant 0 : index
    %4 = vector.load %arg1[%c1, %c0_3] : memref<4x32xf32, #tpu.memory_space<vmem>>, vector<1x32xf32>
    %c2 = arith.constant 2 : index
    %c0_4 = arith.constant 0 : index
    %5 = vector.load %arg1[%c2, %c0_4] : memref<4x32xf32, #tpu.memory_space<vmem>>, vector<1x32xf32>
    %c3 = arith.constant 3 : index
    %c0_5 = arith.constant 0 : index
    %6 = vector.load %arg1[%c3, %c0_5] : memref<4x32xf32, #tpu.memory_space<vmem>>, vector<1x32xf32>
    %c64 = arith.constant 64 : index
    %c0_6 = arith.constant 0 : index
    %7 = vector.load %arg7[%c64, %c0_6] : memref<104x32xf32, #tpu.memory_space<vmem>>, vector<32x32xf32>
    %c96 = arith.constant 96 : index
    %c0_7 = arith.constant 0 : index
    %8 = vector.load %arg7[%c96, %c0_7] : memref<104x32xf32, #tpu.memory_space<vmem>>, vector<1x32xf32>
    %cst = arith.constant dense<0.000000e+00> : vector<1x32xf32>
    %9 = tpu.matmul %3, %7, %cst {dimension_numbers = #tpu.dot_dimension_numbers<[1], [0], [0], [1], [0, 0, 1, 1], [], []>} : vector<1x32xf32>, vector<32x32xf32>, vector<1x32xf32> -> vector<1x32xf32>
    %c0_8 = arith.constant 0 : index
    %c0_9 = arith.constant 0 : index
    %10 = vector.load %arg2[%c0_8, %c0_9] : memref<16x32xf32, #tpu.memory_space<vmem>>, vector<16x32xf32>
    %11 = vector.broadcast %9 : vector<1x32xf32> to vector<16x32xf32>
    %12 = arith.addf %10, %11 : vector<16x32xf32>
    %13 = math.tanh %12 : vector<16x32xf32>
    %cst_10 = arith.constant dense<0.000000e+00> : vector<1x16xf32>
    %14 = tpu.matmul %8, %13, %cst_10 {dimension_numbers = #tpu.dot_dimension_numbers<[1], [1], [0], [0], [0, 0, 1, 0], [], []>} : vector<1x32xf32>, vector<16x32xf32>, vector<1x16xf32> -> vector<1x16xf32>
    %c0_11 = arith.constant 0 : index
    %c0_12 = arith.constant 0 : index
    %15 = vector.load %arg4[%c0_11, %c0_12] : memref<1x16xf32, #tpu.memory_space<vmem>>, vector<1x16xf32>
    %16 = arith.addf %14, %15 : vector<1x16xf32>
    %cst_13 = arith.constant dense<0xFF800000> : vector<1xf32>
    %17 = vector.multi_reduction <maximumf>, %16, %cst_13 [1] : vector<1x16xf32> to vector<1xf32>
    %18 = vector.shape_cast %17 : vector<1xf32> to vector<1x1xf32>
    %19 = vector.broadcast %18 : vector<1x1xf32> to vector<1x16xf32>
    %20 = arith.subf %16, %19 : vector<1x16xf32>
    %21 = math.exp %20 : vector<1x16xf32>
    %cst_14 = arith.constant dense<0.000000e+00> : vector<1xf32>
    %22 = vector.multi_reduction <add>, %21, %cst_14 [1] : vector<1x16xf32> to vector<1xf32>
    %23 = vector.shape_cast %22 : vector<1xf32> to vector<1x1xf32>
    %24 = vector.broadcast %23 : vector<1x1xf32> to vector<1x16xf32>
    %25 = arith.divf %21, %24 : vector<1x16xf32>
    %c0_15 = arith.constant 0 : index
    %c0_16 = arith.constant 0 : index
    %26 = vector.load %arg3[%c0_15, %c0_16] : memref<16x32xf32, #tpu.memory_space<vmem>>, vector<16x32xf32>
    %cst_17 = arith.constant dense<0.000000e+00> : vector<1x32xf32>
    %27 = tpu.matmul %25, %26, %cst_17 {dimension_numbers = #tpu.dot_dimension_numbers<[1], [0], [0], [1], [0, 0, 1, 1], [], []>} : vector<1x16xf32>, vector<16x32xf32>, vector<1x32xf32> -> vector<1x32xf32>
    %c0_18 = arith.constant 0 : index
    %c0_19 = arith.constant 0 : index
    %28 = vector.load %arg5[%c0_18, %c0_19] : memref<176x128xf32, #tpu.memory_space<vmem>>, vector<32x128xf32>
    %c32 = arith.constant 32 : index
    %c0_20 = arith.constant 0 : index
    %29 = vector.load %arg5[%c32, %c0_20] : memref<176x128xf32, #tpu.memory_space<vmem>>, vector<32x128xf32>
    %c64_21 = arith.constant 64 : index
    %c0_22 = arith.constant 0 : index
    %30 = vector.load %arg5[%c64_21, %c0_22] : memref<176x128xf32, #tpu.memory_space<vmem>>, vector<32x128xf32>
    %c160 = arith.constant 160 : index
    %c0_23 = arith.constant 0 : index
    %31 = vector.load %arg5[%c160, %c0_23] : memref<176x128xf32, #tpu.memory_space<vmem>>, vector<1x128xf32>
    %cst_24 = arith.constant dense<0.000000e+00> : vector<1x128xf32>
    %32 = tpu.matmul %2, %28, %cst_24 {dimension_numbers = #tpu.dot_dimension_numbers<[1], [0], [0], [1], [0, 0, 1, 1], [], []>} : vector<1x32xf32>, vector<32x128xf32>, vector<1x128xf32> -> vector<1x128xf32>
    %cst_25 = arith.constant dense<0.000000e+00> : vector<1x128xf32>
    %33 = tpu.matmul %27, %29, %cst_25 {dimension_numbers = #tpu.dot_dimension_numbers<[1], [0], [0], [1], [0, 0, 1, 1], [], []>} : vector<1x32xf32>, vector<32x128xf32>, vector<1x128xf32> -> vector<1x128xf32>
    %34 = arith.addf %32, %33 : vector<1x128xf32>
    %cst_26 = arith.constant dense<0.000000e+00> : vector<1x128xf32>
    %35 = tpu.matmul %3, %30, %cst_26 {dimension_numbers = #tpu.dot_dimension_numbers<[1], [0], [0], [1], [0, 0, 1, 1], [], []>} : vector<1x32xf32>, vector<32x128xf32>, vector<1x128xf32> -> vector<1x128xf32>
    %36 = arith.addf %34, %35 : vector<1x128xf32>
    %37 = arith.addf %36, %31 : vector<1x128xf32>
    %38 = arith.negf %37 : vector<1x128xf32>
    %39 = math.exp %38 : vector<1x128xf32>
    %cst_27 = arith.constant 1.000000e+00 : f32
    %40 = vector.broadcast %cst_27 : f32 to vector<1x128xf32>
    %41 = arith.addf %40, %39 : vector<1x128xf32>
    %42 = arith.divf %40, %41 : vector<1x128xf32>
    %43 = math.tanh %37 : vector<1x128xf32>
    %44 = vector.extract_strided_slice %42 {offsets = [0, 32], sizes = [1, 32], strides = [1, 1]} : vector<1x128xf32> to vector<1x32xf32>
    %45 = arith.mulf %44, %5 : vector<1x32xf32>
    %46 = vector.extract_strided_slice %42 {offsets = [0, 0], sizes = [1, 32], strides = [1, 1]} : vector<1x128xf32> to vector<1x32xf32>
    %47 = vector.extract_strided_slice %43 {offsets = [0, 64], sizes = [1, 32], strides = [1, 1]} : vector<1x128xf32> to vector<1x32xf32>
    %48 = arith.mulf %46, %47 : vector<1x32xf32>
    %49 = arith.addf %45, %48 : vector<1x32xf32>
    %50 = vector.extract_strided_slice %42 {offsets = [0, 96], sizes = [1, 32], strides = [1, 1]} : vector<1x128xf32> to vector<1x32xf32>
    %51 = math.tanh %49 : vector<1x32xf32>
    %52 = arith.mulf %50, %51 : vector<1x32xf32>
    %c96_28 = arith.constant 96 : index
    %c0_29 = arith.constant 0 : index
    %53 = vector.load %arg5[%c96_28, %c0_29] : memref<176x128xf32, #tpu.memory_space<vmem>>, vector<32x128xf32>
    %c128 = arith.constant 128 : index
    %c0_30 = arith.constant 0 : index
    %54 = vector.load %arg5[%c128, %c0_30] : memref<176x128xf32, #tpu.memory_space<vmem>>, vector<32x128xf32>
    %c168 = arith.constant 168 : index
    %c0_31 = arith.constant 0 : index
    %55 = vector.load %arg5[%c168, %c0_31] : memref<176x128xf32, #tpu.memory_space<vmem>>, vector<1x128xf32>
    %cst_32 = arith.constant dense<0.000000e+00> : vector<1x128xf32>
    %56 = tpu.matmul %52, %53, %cst_32 {dimension_numbers = #tpu.dot_dimension_numbers<[1], [0], [0], [1], [0, 0, 1, 1], [], []>} : vector<1x32xf32>, vector<32x128xf32>, vector<1x128xf32> -> vector<1x128xf32>
    %cst_33 = arith.constant dense<0.000000e+00> : vector<1x128xf32>
    %57 = tpu.matmul %4, %54, %cst_33 {dimension_numbers = #tpu.dot_dimension_numbers<[1], [0], [0], [1], [0, 0, 1, 1], [], []>} : vector<1x32xf32>, vector<32x128xf32>, vector<1x128xf32> -> vector<1x128xf32>
    %58 = arith.addf %56, %57 : vector<1x128xf32>
    %59 = arith.addf %58, %55 : vector<1x128xf32>
    %60 = arith.negf %59 : vector<1x128xf32>
    %61 = math.exp %60 : vector<1x128xf32>
    %cst_34 = arith.constant 1.000000e+00 : f32
    %62 = vector.broadcast %cst_34 : f32 to vector<1x128xf32>
    %63 = arith.addf %62, %61 : vector<1x128xf32>
    %64 = arith.divf %62, %63 : vector<1x128xf32>
    %65 = math.tanh %59 : vector<1x128xf32>
    %66 = vector.extract_strided_slice %64 {offsets = [0, 32], sizes = [1, 32], strides = [1, 1]} : vector<1x128xf32> to vector<1x32xf32>
    %67 = arith.mulf %66, %6 : vector<1x32xf32>
    %68 = vector.extract_strided_slice %64 {offsets = [0, 0], sizes = [1, 32], strides = [1, 1]} : vector<1x128xf32> to vector<1x32xf32>
    %69 = vector.extract_strided_slice %65 {offsets = [0, 64], sizes = [1, 32], strides = [1, 1]} : vector<1x128xf32> to vector<1x32xf32>
    %70 = arith.mulf %68, %69 : vector<1x32xf32>
    %71 = arith.addf %67, %70 : vector<1x32xf32>
    %72 = vector.extract_strided_slice %64 {offsets = [0, 96], sizes = [1, 32], strides = [1, 1]} : vector<1x128xf32> to vector<1x32xf32>
    %73 = math.tanh %71 : vector<1x32xf32>
    %74 = arith.mulf %72, %73 : vector<1x32xf32>
    %c0_35 = arith.constant 0 : index
    %c0_36 = arith.constant 0 : index
    %75 = vector.load %arg6[%c0_35, %c0_36] : memref<40x64xf32, #tpu.memory_space<vmem>>, vector<32x64xf32>
    %c32_37 = arith.constant 32 : index
    %c0_38 = arith.constant 0 : index
    %76 = vector.load %arg6[%c32_37, %c0_38] : memref<40x64xf32, #tpu.memory_space<vmem>>, vector<1x64xf32>
    %cst_39 = arith.constant dense<0.000000e+00> : vector<1x64xf32>
    %77 = tpu.matmul %74, %75, %cst_39 {dimension_numbers = #tpu.dot_dimension_numbers<[1], [0], [0], [1], [0, 0, 1, 1], [], []>} : vector<1x32xf32>, vector<32x64xf32>, vector<1x64xf32> -> vector<1x64xf32>
    %78 = arith.addf %77, %76 : vector<1x64xf32>
    %cst_40 = arith.constant dense<0xFF800000> : vector<1xf32>
    %79 = vector.multi_reduction <maximumf>, %78, %cst_40 [1] : vector<1x64xf32> to vector<1xf32>
    %80 = vector.shape_cast %79 : vector<1xf32> to vector<1x1xf32>
    %81 = vector.broadcast %80 : vector<1x1xf32> to vector<1x64xf32>
    %82 = arith.subf %78, %81 : vector<1x64xf32>
    %83 = math.exp %82 : vector<1x64xf32>
    %cst_41 = arith.constant dense<0.000000e+00> : vector<1xf32>
    %84 = vector.multi_reduction <add>, %83, %cst_41 [1] : vector<1x64xf32> to vector<1xf32>
    %85 = vector.shape_cast %84 : vector<1xf32> to vector<1x1xf32>
    %86 = math.log %85 : vector<1x1xf32>
    %87 = vector.broadcast %86 : vector<1x1xf32> to vector<1x64xf32>
    %88 = arith.subf %82, %87 : vector<1x64xf32>
    %c0_42 = arith.constant 0 : index
    %c0_43 = arith.constant 0 : index
    %89 = vector.load %arg8[%c0_42, %c0_43] : memref<1x64xf32, #tpu.memory_space<vmem>>, vector<1x64xf32>
    tpu.vector_store %arg8[%c0_42, %c0_43], %88 {strides = array<i32>} : memref<1x64xf32, #tpu.memory_space<vmem>>, vector<1x64xf32>,
    %c0_44 = arith.constant 0 : index
    %c0_45 = arith.constant 0 : index
    %90 = vector.load %arg10[%c0_44, %c0_45] : memref<1x16xf32, #tpu.memory_space<vmem>>, vector<1x16xf32>
    tpu.vector_store %arg10[%c0_44, %c0_45], %25 {strides = array<i32>} : memref<1x16xf32, #tpu.memory_space<vmem>>, vector<1x16xf32>,
    %c0_46 = arith.constant 0 : index
    %c0_47 = arith.constant 0 : index
    %91 = vector.load %arg9[%c0_46, %c0_47] : memref<4x32xf32, #tpu.memory_space<vmem>>, vector<1x32xf32>
    tpu.vector_store %arg9[%c0_46, %c0_47], %52 {strides = array<i32>} : memref<4x32xf32, #tpu.memory_space<vmem>>, vector<1x32xf32>,
    %c1_48 = arith.constant 1 : index
    %c0_49 = arith.constant 0 : index
    %92 = vector.load %arg9[%c1_48, %c0_49] : memref<4x32xf32, #tpu.memory_space<vmem>>, vector<1x32xf32>
    tpu.vector_store %arg9[%c1_48, %c0_49], %74 {strides = array<i32>} : memref<4x32xf32, #tpu.memory_space<vmem>>, vector<1x32xf32>,
    %c2_50 = arith.constant 2 : index
    %c0_51 = arith.constant 0 : index
    %93 = vector.load %arg9[%c2_50, %c0_51] : memref<4x32xf32, #tpu.memory_space<vmem>>, vector<1x32xf32>
    tpu.vector_store %arg9[%c2_50, %c0_51], %49 {strides = array<i32>} : memref<4x32xf32, #tpu.memory_space<vmem>>, vector<1x32xf32>,
    %c3_52 = arith.constant 3 : index
    %c0_53 = arith.constant 0 : index
    %94 = vector.load %arg9[%c3_52, %c0_53] : memref<4x32xf32, #tpu.memory_space<vmem>>, vector<1x32xf32>
    tpu.vector_store %arg9[%c3_52, %c0_53], %71 {strides = array<i32>} : memref<4x32xf32, #tpu.memory_space<vmem>>, vector<1x32xf32>,
    return
  }
}

</mosaic_0001>

<llo_original>
// kernel: tpu_custom_call.1
$region0: #{tpu_custom_call.1}
  #allocation0 [shape = 'u32[]', space=smem, size = 0x4, offset = 0x4, fixed_abs, tag = 'smem constant byte address 0x4 - core index']
  #allocation1 [shape = 'u32[144,128]{1,0:T(1,128)}', space=vmem, size = 0x12000, scoped, tag = 'internal scratch']
  #allocation2 [shape = 's32[1]{0:T(128)S(6)}', space=smem, size = 0x200, scoped, tag = 'scoped memory for tpu_custom_call.1']
  %s0 = inlined_call_operand.<no memory space> [shape: s32[1], index: 0, kind: input, shape index: {}]
  %s1 = inlined_call_operand.vmem [shape: f32[4,32], index: 1, kind: input, shape index: {}]
  %s2 = inlined_call_operand.vmem [shape: f32[16,32], index: 2, kind: input, shape index: {}]
  %s3 = inlined_call_operand.vmem [shape: f32[16,32], index: 3, kind: input, shape index: {}]
  %s4 = inlined_call_operand.vmem [shape: f32[1,16], index: 4, kind: input, shape index: {}]
  %s5 = inlined_call_operand.hbm [shape: f32[176,128], index: 5, kind: input, shape index: {}]
  %s6 = inlined_call_operand.vmem [shape: f32[40,64], index: 6, kind: input, shape index: {}]
  %s7 = inlined_call_operand.vmem [shape: f32[104,32], index: 7, kind: input, shape index: {}]
  %s8 = inlined_call_operand.hbm [shape: f32[1,64], index: 8, kind: output, shape index: {0}]
  %s9 = inlined_call_operand.hbm [shape: f32[4,32], index: 9, kind: output, shape index: {1}]
  %s10 = inlined_call_operand.hbm [shape: f32[1,16], index: 10, kind: output, shape index: {2}]
  %11 = xla_tuple %s8, %s9, %s10
  %s12 = sld [smem:[#allocation0]]
  $region62: #{tpu_custom_call.1} parent=0
    _
  %s14 = ssub.s32 1, %s12
  %s15 = scalar_select 0, %s14, %s12
  %16 = sst [smem:[#allocation2]] %s0
  $region1: #{tpu_custom_call.1} parent=0
    #allocation3 [shape = 'u8[90112]{0}', space=vmem, size = 0x16000, scoped, tag = 'input window, operand 5, single buffered']
    #allocation4 [shape = 's32[1]{0}', space=sflag, size = 0x4, scoped, tag = 'scoped memory for tpu_custom_call.1']
    #allocation5 [shape = 's32[1]{0}', space=sflag, size = 0x4, scoped, tag = 'scoped memory for tpu_custom_call.1']
    #allocation6 [shape = 'u8[512]{0}', space=vmem, size = 0x400, scoped, tag = 'output window, operand 0, single buffered']
    #allocation7 [shape = 'u8[2048]{0}', space=vmem, size = 0x800, scoped, tag = 'output window, operand 1, single buffered']
    #allocation8 [shape = 's32[1]{0}', space=sflag, size = 0x4, scoped, tag = 'scoped memory for tpu_custom_call.1']
    #allocation9 [shape = 'u8[512]{0}', space=vmem, size = 0x400, scoped, tag = 'output window, operand 2, single buffered']
    %17 = vsyncpa [#allocation4], 0
    %18 = vsyncpa [#allocation5], 0
    %19 = vsyncpa [#allocation8], 0
    // Predicated region
    $region2: #{tpu_custom_call.1} parent=1 // pred_check
      _
    $region3: #{tpu_custom_call.1} parent=1 // pred_check_branch
      %21 = sbr.rel (0) target = $region5
    $region4: #{tpu_custom_call.1} parent=1 // pred_region
      _
    $region5: #{tpu_custom_call.1} parent=1 // pred_fallthru
      _
    // Predicated region
    $region6: #{tpu_custom_call.1} parent=1 // pred_check
      _
    $region7: #{tpu_custom_call.1} parent=1 // pred_check_branch
      %23 = sbr.rel (0) target = $region9
    $region8: #{tpu_custom_call.1} parent=1 // pred_region
      _
    $region9: #{tpu_custom_call.1} parent=1 // pred_fallthru
      _
    // Predicated region
    $region10: #{tpu_custom_call.1} parent=1 // pred_check
      _
    $region11: #{tpu_custom_call.1} parent=1 // pred_check_branch
      %25 = sbr.rel (0) target = $region13
    $region12: #{tpu_custom_call.1} parent=1 // pred_region
      _
    $region13: #{tpu_custom_call.1} parent=1 // pred_fallthru
      _
    // Predicated region
    $region14: #{tpu_custom_call.1} parent=1 // pred_check
      _
    $region15: #{tpu_custom_call.1} parent=1 // pred_check_branch
      %27 = sbr.rel (0) target = $region17
    $region16: #{tpu_custom_call.1} parent=1 // pred_region
      _
    $region17: #{tpu_custom_call.1} parent=1 // pred_fallthru
      _
    // Predicated region
    $region18: #{tpu_custom_call.1} parent=1 // pred_check
      _
    $region19: #{tpu_custom_call.1} parent=1 // pred_check_branch
      %29 = sbr.rel (0) target = $region21
    $region20: #{tpu_custom_call.1} parent=1 // pred_region
      _
    $region21: #{tpu_custom_call.1} parent=1 // pred_fallthru
      _
    // Predicated region
    $region22: #{tpu_custom_call.1} parent=1 // pred_check
      _
    $region23: #{tpu_custom_call.1} parent=1 // pred_check_branch
      %31 = sbr.rel (0) target = $region25
    $region24: #{tpu_custom_call.1} parent=1 // pred_region
      %s33 = ssub.s32 2816, 2816
      %34 = vsyncadd [#allocation4], %s33
      %s35 = sshll.u32 [#allocation3], 4
      %s36 = int_to_ptr.vmem [resolvable:$true] %s35
      %41 = dma.hbm_to_vmem [thread:$0]  %s5, 2816, %s36, [#allocation4], 128, 128, 8
    $region25: #{tpu_custom_call.1} parent=1 // pred_fallthru
      _
    // Predicated region
    $region26: #{tpu_custom_call.1} parent=1 // pred_check
      _
    $region27: #{tpu_custom_call.1} parent=1 // pred_check_branch
      %43 = sbr.rel (0) target = $region29
    $region28: #{tpu_custom_call.1} parent=1 // pred_region
      _
    $region29: #{tpu_custom_call.1} parent=1 // pred_fallthru
      _
    // Predicated region
    $region30: #{tpu_custom_call.1} parent=1 // pred_check
      _
    $region31: #{tpu_custom_call.1} parent=1 // pred_check_branch
      %45 = sbr.rel (0) target = $region33
    $region32: #{tpu_custom_call.1} parent=1 // pred_region
      _
    $region33: #{tpu_custom_call.1} parent=1 // pred_fallthru
      _
    // Predicated region
    $region34: #{tpu_custom_call.1} parent=1 // pred_check
      _
    $region35: #{tpu_custom_call.1} parent=1 // pred_check_branch
      %47 = sbr.rel (0) target = $region37
    $region36: #{tpu_custom_call.1} parent=1 // pred_region
      %48 = dma.done [#allocation4], 2816
    $region37: #{tpu_custom_call.1} parent=1 // pred_fallthru
      _
    %s49 = sld [smem:[#allocation2]]
    %s50 = scalar_lea.vmem %s7, %s49
    %v51 = vld [vmem:[%s50] sm:$0x1]
    %v52 = vld [vmem:[%s1] sm:$0x1]
    %v53 = vld [vmem:[%s1 + $0x1] sm:$0x1]
    %v54 = vld [vmem:[%s1 + $0x2] sm:$0x1]
    %v55 = vld [vmem:[%s1 + $0x3] sm:$0x1]
    %v56 = vld [vmem:[%s7 + $0x40] sm:$0xff]
    %v57 = vld [vmem:[%s7 + $0x48] sm:$0xff]
    %v58 = vld [vmem:[%s7 + $0x50] sm:$0xff]
    %v59 = vld [vmem:[%s7 + $0x58] sm:$0xff]
    %v60 = vld [vmem:[%s7 + $0x60] sm:$0x1]
    %vm61 = vcmask 261120
    %v63 = vsel %vm61, %v52, 0
    %65 = vmatprep.subr.mxu0 0.0
    %66 = vmatpush1.msra.mxu0 %v56
    %67 = vmatprep.subr.mxu0 0.0
    %68 = vmatpush1.msra.mxu0 %v57
    %69 = vmatprep.subr.mxu0 0.0
    %70 = vmatpush1.msra.mxu0 %v58
    %71 = vmatprep.subr.mxu0 0.0
    %72 = vmatpush1.msra.mxu0 %v59
    %73 = vmatprep.subr.mxu0 0.0
    %74 = vmatpush1.msra.mxu0 0.0
    %75 = vmatprep.subr.mxu0 0.0
    %76 = vmatpush1.msra.mxu0 0.0
    %77 = vmatprep.subr.mxu0 0.0
    %78 = vmatpush1.msra.mxu0 0.0
    %79 = vmatprep.subr.mxu0 0.0
    %80 = vmatpush1.msra.mxu0 0.0
    %81 = vmatprep.subr.mxu0 0.0
    %82 = vmatpush1.msra.mxu0 0.0
    %83 = vmatprep.subr.mxu0 0.0
    %84 = vmatpush1.msra.mxu0 0.0
    %85 = vmatprep.subr.mxu0 0.0
    %86 = vmatpush1.msra.mxu0 0.0
    %87 = vmatprep.subr.mxu0 0.0
    %88 = vmatpush1.msra.mxu0 0.0
    %89 = vmatprep.subr.mxu0 0.0
    %90 = vmatpush1.msra.mxu0 0.0
    %91 = vmatprep.subr.mxu0 0.0
    %92 = vmatpush1.msra.mxu0 0.0
    %93 = vmatprep.subr.mxu0 0.0
    %94 = vmatpush1.msra.mxu0 0.0
    %95 = vmatprep.subr.mxu0 0.0
    %96 = vmatpush1.msra.mxu0 0.0
    %97 = vmatprep.subr.mxu0 0.0
    %98 = vmatpush1.msra.mxu0 0.0
    %99 = vmatprep.subr.mxu0 0.0
    %100 = vmatpush1.msra.mxu0 0.0
    %101 = vmatprep.subr.mxu0 0.0
    %102 = vmatpush1.msra.mxu0 0.0
    %103 = vmatprep.subr.mxu0 0.0
    %104 = vmatpush1.msra.mxu0 0.0
    %105 = vmatprep.subr.mxu0 0.0
    %106 = vmatpush1.msra.mxu0 0.0
    %107 = vmatprep.subr.mxu0 0.0
    %108 = vmatpush1.msra.mxu0 0.0
    %109 = vmatprep.subr.mxu0 0.0
    %110 = vmatpush1.msra.mxu0 0.0
    %111 = vmatprep.subr.mxu0 0.0
    %112 = vmatpush1.msra.mxu0 0.0
    %113 = vmatprep.subr.mxu0 0.0
    %114 = vmatpush1.msra.mxu0 0.0
    %115 = vmatprep.subr.mxu0 0.0
    %116 = vmatpush1.msra.mxu0 0.0
    %117 = vmatprep.subr.mxu0 0.0
    %118 = vmatpush1.msra.mxu0 0.0
    %119 = vmatprep.subr.mxu0 0.0
    %120 = vmatpush1.msra.mxu0 0.0
    %121 = vmatprep.subr.mxu0 0.0
    %122 = vmatpush1.msra.mxu0 0.0
    %123 = vmatprep.subr.mxu0 0.0
    %124 = vmatpush1.msra.mxu0 0.0
    %125 = vmatprep.subr.mxu0 0.0
    %126 = vmatpush1.msra.mxu0 0.0
    %127 = vmatprep.subr.mxu0 0.0
    %128 = vmatpush1.msra.mxu0 0.0
    %129 = vmatprep.mubr.f32.mxu0 0.0
    %130 = vmatmul.mubr.f32.gmra.mrb[0].mxu0 %v63
    %v131 = vpop.f32.mrb[0].mxu0
    %v132 = vadd.f32 0.0, %v131
    %v133 = vpop.f32.mrb[0].mxu0
    %134 = vdwg.mxu0
    %v135 = vld [vmem:[%s2] sm:$0xff]
    %v136 = vld [vmem:[%s2 + $0x8] sm:$0xff]
    %v137 = vlaneseq
    %v138 = vshrl.u32 %v137, 7
    %v139 = vsub.s32 0, %v138
    %v140 = vrot.slane %v132, %v139
    %v141 = vadd.f32 %v135, %v140
    %v142 = vadd.f32 %v136, %v140
    %v143 = vtanh.pop %v141
    %v144 = vtanh.pop %v142
    %v145 = vld [vmem:[%s4] sm:$0x1]
    %v147 = vsel %vm61, %v60, 0
    %v150 = vsel %vm61, %v143, 0
    %v153 = vsel %vm61, %v144, 0
    %155 = vmatprep.subr.mxu0 0.0
    %156 = vmatpush1.xpose.msra.mxu0 %v150
    %157 = vmatprep.subr.mxu0 0.0
    %158 = vmatpush1.xpose.msra.mxu0 %v153
    %159 = vmatprep.subr.mxu0 0.0
    %160 = vmatpush1.xpose.msra.mxu0 0.0
    %161 = vmatprep.subr.mxu0 0.0
    %162 = vmatpush1.xpose.msra.mxu0 0.0
    %163 = vmatprep.subr.mxu0 0.0
    %164 = vmatpush1.xpose.msra.mxu0 0.0
    %165 = vmatprep.subr.mxu0 0.0
    %166 = vmatpush1.xpose.msra.mxu0 0.0
    %167 = vmatprep.subr.mxu0 0.0
    %168 = vmatpush1.xpose.msra.mxu0 0.0
    %169 = vmatprep.subr.mxu0 0.0
    %170 = vmatpush1.xpose.msra.mxu0 0.0
    %171 = vmatprep.subr.mxu0 0.0
    %172 = vmatpush1.xpose.msra.mxu0 0.0
    %173 = vmatprep.subr.mxu0 0.0
    %174 = vmatpush1.xpose.msra.mxu0 0.0
    %175 = vmatprep.subr.mxu0 0.0
    %176 = vmatpush1.xpose.msra.mxu0 0.0
    %177 = vmatprep.subr.mxu0 0.0
    %178 = vmatpush1.xpose.msra.mxu0 0.0
    %179 = vmatprep.subr.mxu0 0.0
    %180 = vmatpush1.xpose.msra.mxu0 0.0
    %181 = vmatprep.subr.mxu0 0.0
    %182 = vmatpush1.xpose.msra.mxu0 0.0
    %183 = vmatprep.subr.mxu0 0.0
    %184 = vmatpush1.xpose.msra.mxu0 0.0
    %185 = vmatprep.subr.mxu0 0.0
    %186 = vmatpush1.xpose.msra.mxu0 0.0
    %187 = vmatprep.subr.mxu0 0.0
    %188 = vmatpush1.xpose.msra.mxu0 0.0
    %189 = vmatprep.subr.mxu0 0.0
    %190 = vmatpush1.xpose.msra.mxu0 0.0
    %191 = vmatprep.subr.mxu0 0.0
    %192 = vmatpush1.xpose.msra.mxu0 0.0
    %193 = vmatprep.subr.mxu0 0.0
    %194 = vmatpush1.xpose.msra.mxu0 0.0
    %195 = vmatprep.subr.mxu0 0.0
    %196 = vmatpush1.xpose.msra.mxu0 0.0
    %197 = vmatprep.subr.mxu0 0.0
    %198 = vmatpush1.xpose.msra.mxu0 0.0
    %199 = vmatprep.subr.mxu0 0.0
    %200 = vmatpush1.xpose.msra.mxu0 0.0
    %201 = vmatprep.subr.mxu0 0.0
    %202 = vmatpush1.xpose.msra.mxu0 0.0
    %203 = vmatprep.subr.mxu0 0.0
    %204 = vmatpush1.xpose.msra.mxu0 0.0
    %205 = vmatprep.subr.mxu0 0.0
    %206 = vmatpush1.xpose.msra.mxu0 0.0
    %207 = vmatprep.subr.mxu0 0.0
    %208 = vmatpush1.xpose.msra.mxu0 0.0
    %209 = vmatprep.subr.mxu0 0.0
    %210 = vmatpush1.xpose.msra.mxu0 0.0
    %211 = vmatprep.subr.mxu0 0.0
    %212 = vmatpush1.xpose.msra.mxu0 0.0
    %213 = vmatprep.subr.mxu0 0.0
    %214 = vmatpush1.xpose.msra.mxu0 0.0
    %215 = vmatprep.subr.mxu0 0.0
    %216 = vmatpush1.xpose.msra.mxu0 0.0
    %217 = vmatprep.subr.mxu0 0.0
    %218 = vmatpush1.xpose.msra.mxu0 0.0
    %219 = vmatprep.mubr.f32.mxu0 0.0
    %220 = vmatmul.mubr.f32.gmra.mrb[0].mxu0 %v147
    %v221 = vpop.f32.mrb[0].mxu0
    %v222 = vadd.f32 %v145, %v221
    %v223 = vpop.f32.mrb[0].mxu0
    %224 = vdwg.mxu0
    %vm225 = vcmask 122880
    %v226 = vsel %vm225, %v222, -inf
    %227 = vmax.xlane.f32.xlu0 %v226
    %v228 = vpop.xlane.xlu0 %227
    %v229 = vsub.f32 %v222, %v228
    %v230 = vmul.f32 %v229, 1.442695
    %v231 = vpow.pop %v230
    %v232 = vsel %vm225, %v231, 0.0
    %233 = vadd.xlane.f32.xlu0 %v232
    %v234 = vpop.xlane.xlu0 %233
    %v235 = vrcp.pop %v234
    %v236 = vmul.f32 %v231, %v235
    %v237 = vld [vmem:[%s3] sm:$0xff]
    %v238 = vld [vmem:[%s3 + $0x8] sm:$0xff]
    %vm239 = vcmask 130048
    %v241 = vsel %vm239, %v236, 0
    %243 = vmatprep.subr.mxu0 0.0
    %244 = vmatpush1.msra.mxu0 %v237
    %245 = vmatprep.subr.mxu0 0.0
    %246 = vmatpush1.msra.mxu0 %v238
    %247 = vmatprep.subr.mxu0 0.0
    %248 = vmatpush1.msra.mxu0 0.0
    %249 = vmatprep.subr.mxu0 0.0
    %250 = vmatpush1.msra.mxu0 0.0
    %251 = vmatprep.subr.mxu0 0.0
    %252 = vmatpush1.msra.mxu0 0.0
    %253 = vmatprep.subr.mxu0 0.0
    %254 = vmatpush1.msra.mxu0 0.0
    %255 = vmatprep.subr.mxu0 0.0
    %256 = vmatpush1.msra.mxu0 0.0
    %257 = vmatprep.subr.mxu0 0.0
    %258 = vmatpush1.msra.mxu0 0.0
    %259 = vmatprep.subr.mxu0 0.0
    %260 = vmatpush1.msra.mxu0 0.0
    %261 = vmatprep.subr.mxu0 0.0
    %262 = vmatpush1.msra.mxu0 0.0
    %263 = vmatprep.subr.mxu0 0.0
    %264 = vmatpush1.msra.mxu0 0.0
    %265 = vmatprep.subr.mxu0 0.0
    %266 = vmatpush1.msra.mxu0 0.0
    %267 = vmatprep.subr.mxu0 0.0
    %268 = vmatpush1.msra.mxu0 0.0
    %269 = vmatprep.subr.mxu0 0.0
    %270 = vmatpush1.msra.mxu0 0.0
    %271 = vmatprep.subr.mxu0 0.0
    %272 = vmatpush1.msra.mxu0 0.0
    %273 = vmatprep.subr.mxu0 0.0
    %274 = vmatpush1.msra.mxu0 0.0
    %275 = vmatprep.subr.mxu0 0.0
    %276 = vmatpush1.msra.mxu0 0.0
    %277 = vmatprep.subr.mxu0 0.0
    %278 = vmatpush1.msra.mxu0 0.0
    %279 = vmatprep.subr.mxu0 0.0
    %280 = vmatpush1.msra.mxu0 0.0
    %281 = vmatprep.subr.mxu0 0.0
    %282 = vmatpush1.msra.mxu0 0.0
    %283 = vmatprep.subr.mxu0 0.0
    %284 = vmatpush1.msra.mxu0 0.0
    %285 = vmatprep.subr.mxu0 0.0
    %286 = vmatpush1.msra.mxu0 0.0
    %287 = vmatprep.subr.mxu0 0.0
    %288 = vmatpush1.msra.mxu0 0.0
    %289 = vmatprep.subr.mxu0 0.0
    %290 = vmatpush1.msra.mxu0 0.0
    %291 = vmatprep.subr.mxu0 0.0
    %292 = vmatpush1.msra.mxu0 0.0
    %293 = vmatprep.subr.mxu0 0.0
    %294 = vmatpush1.msra.mxu0 0.0
    %295 = vmatprep.subr.mxu0 0.0
    %296 = vmatpush1.msra.mxu0 0.0
    %297 = vmatprep.subr.mxu0 0.0
    %298 = vmatpush1.msra.mxu0 0.0
    %299 = vmatprep.subr.mxu0 0.0
    %300 = vmatpush1.msra.mxu0 0.0
    %301 = vmatprep.subr.mxu0 0.0
    %302 = vmatpush1.msra.mxu0 0.0
    %303 = vmatprep.subr.mxu0 0.0
    %304 = vmatpush1.msra.mxu0 0.0
    %305 = vmatprep.subr.mxu0 0.0
    %306 = vmatpush1.msra.mxu0 0.0
    %307 = vmatprep.mubr.f32.mxu0 0.0
    %308 = vmatmul.mubr.f32.gmra.mrb[0].mxu0 %v241
    %v309 = vpop.f32.mrb[0].mxu0
    %v310 = vadd.f32 0.0, %v309
    %v311 = vpop.f32.mrb[0].mxu0
    %312 = vdwg.mxu0
    %v313 = vld [vmem:[#allocation3] sm:$0xff]
    %v314 = vld [vmem:[#allocation3 + $0x8] sm:$0xff]
    %v315 = vld [vmem:[#allocation3 + $0x10] sm:$0xff]
    %v316 = vld [vmem:[#allocation3 + $0x18] sm:$0xff]
    %v317 = vld [vmem:[#allocation3 + $0x20] sm:$0xff]
    %v318 = vld [vmem:[#allocation3 + $0x28] sm:$0xff]
    %v319 = vld [vmem:[#allocation3 + $0x30] sm:$0xff]
    %v320 = vld [vmem:[#allocation3 + $0x38] sm:$0xff]
    %v321 = vld [vmem:[#allocation3 + $0x40] sm:$0xff]
    %v322 = vld [vmem:[#allocation3 + $0x48] sm:$0xff]
    %v323 = vld [vmem:[#allocation3 + $0x50] sm:$0xff]
    %v324 = vld [vmem:[#allocation3 + $0x58] sm:$0xff]
    %v325 = vld [vmem:[#allocation3 + $0xa0] sm:$0x1]
    %v327 = vsel %vm61, %v310, 0
    %329 = vmatprep.subr.mxu0 0.0
    %330 = vmatpush1.msra.mxu0 %v317
    %331 = vmatprep.subr.mxu0 0.0
    %332 = vmatpush1.msra.mxu0 %v318
    %333 = vmatprep.subr.mxu0 0.0
    %334 = vmatpush1.msra.mxu0 %v319
    %335 = vmatprep.subr.mxu0 0.0
    %336 = vmatpush1.msra.mxu0 %v320
    %337 = vmatprep.subr.mxu0 0.0
    %338 = vmatpush1.msra.mxu0 0.0
    %339 = vmatprep.subr.mxu0 0.0
    %340 = vmatpush1.msra.mxu0 0.0
    %341 = vmatprep.subr.mxu0 0.0
    %342 = vmatpush1.msra.mxu0 0.0
    %343 = vmatprep.subr.mxu0 0.0
    %344 = vmatpush1.msra.mxu0 0.0
    %345 = vmatprep.subr.mxu0 0.0
    %346 = vmatpush1.msra.mxu0 0.0
    %347 = vmatprep.subr.mxu0 0.0
    %348 = vmatpush1.msra.mxu0 0.0
    %349 = vmatprep.subr.mxu0 0.0
    %350 = vmatpush1.msra.mxu0 0.0
    %351 = vmatprep.subr.mxu0 0.0
    %352 = vmatpush1.msra.mxu0 0.0
    %353 = vmatprep.subr.mxu0 0.0
    %354 = vmatpush1.msra.mxu0 0.0
    %355 = vmatprep.subr.mxu0 0.0
    %356 = vmatpush1.msra.mxu0 0.0
    %357 = vmatprep.subr.mxu0 0.0
    %358 = vmatpush1.msra.mxu0 0.0
    %359 = vmatprep.subr.mxu0 0.0
    %360 = vmatpush1.msra.mxu0 0.0
    %361 = vmatprep.subr.mxu0 0.0
    %362 = vmatpush1.msra.mxu0 0.0
    %363 = vmatprep.subr.mxu0 0.0
    %364 = vmatpush1.msra.mxu0 0.0
    %365 = vmatprep.subr.mxu0 0.0
    %366 = vmatpush1.msra.mxu0 0.0
    %367 = vmatprep.subr.mxu0 0.0
    %368 = vmatpush1.msra.mxu0 0.0
    %369 = vmatprep.subr.mxu0 0.0
    %370 = vmatpush1.msra.mxu0 0.0
    %371 = vmatprep.subr.mxu0 0.0
    %372 = vmatpush1.msra.mxu0 0.0
    %373 = vmatprep.subr.mxu0 0.0
    %374 = vmatpush1.msra.mxu0 0.0
    %375 = vmatprep.subr.mxu0 0.0
    %376 = vmatpush1.msra.mxu0 0.0
    %377 = vmatprep.subr.mxu0 0.0
    %378 = vmatpush1.msra.mxu0 0.0
    %379 = vmatprep.subr.mxu0 0.0
    %380 = vmatpush1.msra.mxu0 0.0
    %381 = vmatprep.subr.mxu0 0.0
    %382 = vmatpush1.msra.mxu0 0.0
    %383 = vmatprep.subr.mxu0 0.0
    %384 = vmatpush1.msra.mxu0 0.0
    %385 = vmatprep.subr.mxu0 0.0
    %386 = vmatpush1.msra.mxu0 0.0
    %387 = vmatprep.subr.mxu0 0.0
    %388 = vmatpush1.msra.mxu0 0.0
    %389 = vmatprep.subr.mxu0 0.0
    %390 = vmatpush1.msra.mxu0 0.0
    %391 = vmatprep.subr.mxu0 0.0
    %392 = vmatpush1.msra.mxu0 0.0
    %393 = vmatprep.mubr.f32.mxu0 0.0
    %394 = vmatmul.mubr.f32.gmra.mrb[0].mxu0 %v327
    %v395 = vpop.f32.mrb[0].mxu0
    %v396 = vadd.f32 0.0, %v395
    %v397 = vpop.f32.mrb[0].mxu0
    %398 = vdwg.mxu0
    %v400 = vsel %vm61, %v51, 0
    %402 = vmatprep.subr.mxu0 0.0
    %403 = vmatpush1.msra.mxu0 %v313
    %404 = vmatprep.subr.mxu0 0.0
    %405 = vmatpush1.msra.mxu0 %v314
    %406 = vmatprep.subr.mxu0 0.0
    %407 = vmatpush1.msra.mxu0 %v315
    %408 = vmatprep.subr.mxu0 0.0
    %409 = vmatpush1.msra.mxu0 %v316
    %410 = vmatprep.subr.mxu0 0.0
    %411 = vmatpush1.msra.mxu0 0.0
    %412 = vmatprep.subr.mxu0 0.0
    %413 = vmatpush1.msra.mxu0 0.0
    %414 = vmatprep.subr.mxu0 0.0
    %415 = vmatpush1.msra.mxu0 0.0
    %416 = vmatprep.subr.mxu0 0.0
    %417 = vmatpush1.msra.mxu0 0.0
    %418 = vmatprep.subr.mxu0 0.0
    %419 = vmatpush1.msra.mxu0 0.0
    %420 = vmatprep.subr.mxu0 0.0
    %421 = vmatpush1.msra.mxu0 0.0
    %422 = vmatprep.subr.mxu0 0.0
    %423 = vmatpush1.msra.mxu0 0.0
    %424 = vmatprep.subr.mxu0 0.0
    %425 = vmatpush1.msra.mxu0 0.0
    %426 = vmatprep.subr.mxu0 0.0
    %427 = vmatpush1.msra.mxu0 0.0
    %428 = vmatprep.subr.mxu0 0.0
    %429 = vmatpush1.msra.mxu0 0.0
    %430 = vmatprep.subr.mxu0 0.0
    %431 = vmatpush1.msra.mxu0 0.0
    %432 = vmatprep.subr.mxu0 0.0
    %433 = vmatpush1.msra.mxu0 0.0
    %434 = vmatprep.subr.mxu0 0.0
    %435 = vmatpush1.msra.mxu0 0.0
    %436 = vmatprep.subr.mxu0 0.0
    %437 = vmatpush1.msra.mxu0 0.0
    %438 = vmatprep.subr.mxu0 0.0
    %439 = vmatpush1.msra.mxu0 0.0
    %440 = vmatprep.subr.mxu0 0.0
    %441 = vmatpush1.msra.mxu0 0.0
    %442 = vmatprep.subr.mxu0 0.0
    %443 = vmatpush1.msra.mxu0 0.0
    %444 = vmatprep.subr.mxu0 0.0
    %445 = vmatpush1.msra.mxu0 0.0
    %446 = vmatprep.subr.mxu0 0.0
    %447 = vmatpush1.msra.mxu0 0.0
    %448 = vmatprep.subr.mxu0 0.0
    %449 = vmatpush1.msra.mxu0 0.0
    %450 = vmatprep.subr.mxu0 0.0
    %451 = vmatpush1.msra.mxu0 0.0
    %452 = vmatprep.subr.mxu0 0.0
    %453 = vmatpush1.msra.mxu0 0.0
    %454 = vmatprep.subr.mxu0 0.0
    %455 = vmatpush1.msra.mxu0 0.0
    %456 = vmatprep.subr.mxu0 0.0
    %457 = vmatpush1.msra.mxu0 0.0
    %458 = vmatprep.subr.mxu0 0.0
    %459 = vmatpush1.msra.mxu0 0.0
    %460 = vmatprep.subr.mxu0 0.0
    %461 = vmatpush1.msra.mxu0 0.0
    %462 = vmatprep.subr.mxu0 0.0
    %463 = vmatpush1.msra.mxu0 0.0
    %464 = vmatprep.subr.mxu0 0.0
    %465 = vmatpush1.msra.mxu0 0.0
    %466 = vmatprep.mubr.f32.mxu0 0.0
    %467 = vmatmul.mubr.f32.gmra.mrb[0].mxu0 %v400
    %v468 = vpop.f32.mrb[0].mxu0
    %v469 = vadd.f32 %v396, %v468
    %v470 = vpop.f32.mrb[0].mxu0
    %471 = vdwg.mxu0
    %472 = vmatprep.subr.mxu0 0.0
    %473 = vmatpush1.msra.mxu0 %v321
    %474 = vmatprep.subr.mxu0 0.0
    %475 = vmatpush1.msra.mxu0 %v322
    %476 = vmatprep.subr.mxu0 0.0
    %477 = vmatpush1.msra.mxu0 %v323
    %478 = vmatprep.subr.mxu0 0.0
    %479 = vmatpush1.msra.mxu0 %v324
    %480 = vmatprep.subr.mxu0 0.0
    %481 = vmatpush1.msra.mxu0 0.0
    %482 = vmatprep.subr.mxu0 0.0
    %483 = vmatpush1.msra.mxu0 0.0
    %484 = vmatprep.subr.mxu0 0.0
    %485 = vmatpush1.msra.mxu0 0.0
    %486 = vmatprep.subr.mxu0 0.0
    %487 = vmatpush1.msra.mxu0 0.0
    %488 = vmatprep.subr.mxu0 0.0
    %489 = vmatpush1.msra.mxu0 0.0
    %490 = vmatprep.subr.mxu0 0.0
    %491 = vmatpush1.msra.mxu0 0.0
    %492 = vmatprep.subr.mxu0 0.0
    %493 = vmatpush1.msra.mxu0 0.0
    %494 = vmatprep.subr.mxu0 0.0
    %495 = vmatpush1.msra.mxu0 0.0
    %496 = vmatprep.subr.mxu0 0.0
    %497 = vmatpush1.msra.mxu0 0.0
    %498 = vmatprep.subr.mxu0 0.0
    %499 = vmatpush1.msra.mxu0 0.0
    %500 = vmatprep.subr.mxu0 0.0
    %501 = vmatpush1.msra.mxu0 0.0
    %502 = vmatprep.subr.mxu0 0.0
    %503 = vmatpush1.msra.mxu0 0.0
    %504 = vmatprep.subr.mxu0 0.0
    %505 = vmatpush1.msra.mxu0 0.0
    %506 = vmatprep.subr.mxu0 0.0
    %507 = vmatpush1.msra.mxu0 0.0
    %508 = vmatprep.subr.mxu0 0.0
    %509 = vmatpush1.msra.mxu0 0.0
    %510 = vmatprep.subr.mxu0 0.0
    %511 = vmatpush1.msra.mxu0 0.0
    %512 = vmatprep.subr.mxu0 0.0
    %513 = vmatpush1.msra.mxu0 0.0
    %514 = vmatprep.subr.mxu0 0.0
    %515 = vmatpush1.msra.mxu0 0.0
    %516 = vmatprep.subr.mxu0 0.0
    %517 = vmatpush1.msra.mxu0 0.0
    %518 = vmatprep.subr.mxu0 0.0
    %519 = vmatpush1.msra.mxu0 0.0
    %520 = vmatprep.subr.mxu0 0.0
    %521 = vmatpush1.msra.mxu0 0.0
    %522 = vmatprep.subr.mxu0 0.0
    %523 = vmatpush1.msra.mxu0 0.0
    %524 = vmatprep.subr.mxu0 0.0
    %525 = vmatpush1.msra.mxu0 0.0
    %526 = vmatprep.subr.mxu0 0.0
    %527 = vmatpush1.msra.mxu0 0.0
    %528 = vmatprep.subr.mxu0 0.0
    %529 = vmatpush1.msra.mxu0 0.0
    %530 = vmatprep.subr.mxu0 0.0
    %531 = vmatpush1.msra.mxu0 0.0
    %532 = vmatprep.subr.mxu0 0.0
    %533 = vmatpush1.msra.mxu0 0.0
    %534 = vmatprep.subr.mxu0 0.0
    %535 = vmatpush1.msra.mxu0 0.0
    %536 = vmatprep.mubr.f32.mxu0 0.0
    %537 = vmatmul.mubr.f32.gmra.mrb[0].mxu0 %v63
    %v538 = vpop.f32.mrb[0].mxu0
    %v539 = vadd.f32 0.0, %v538
    %v540 = vpop.f32.mrb[0].mxu0
    %541 = vdwg.mxu0
    %v542 = vadd.f32 %v469, %v539
    %v543 = vadd.f32 %v542, %v325
    %v544 = vxor.u32 %v543, 2147483648
    %v545 = vmul.f32 %v544, 1.442695
    %v546 = vpow.pop %v545
    %v547 = vadd.f32 %v546, 1.0
    %v548 = vrcp.pop %v547
    %v549 = vmul.f32 1.0, %v548
    %v550 = vtanh.pop %v543
    %552 = vrot.lane.b32.xlu0 %v54, 32
    %v553 = vpop.permute.xlu0 %552
    %v555 = vmul.f32 %v549, %v553
    %557 = vrot.lane.b32.xlu0 %v550, 64
    %v558 = vpop.permute.xlu0 %557
    %v560 = vmul.f32 %v549, %v558
    %562 = vrot.lane.b32.xlu0 %v560, 32
    %v563 = vpop.permute.xlu0 %562
    %v565 = vadd.f32 %v555, %v563
    %v566 = vtanh.pop %v565
    %568 = vrot.lane.b32.xlu0 %v566, 64
    %v569 = vpop.permute.xlu0 %568
    %v571 = vmul.f32 %v549, %v569
    %v572 = vld [vmem:[#allocation3 + $0x60] sm:$0xff]
    %v573 = vld [vmem:[#allocation3 + $0x68] sm:$0xff]
    %v574 = vld [vmem:[#allocation3 + $0x70] sm:$0xff]
    %v575 = vld [vmem:[#allocation3 + $0x78] sm:$0xff]
    %v576 = vld [vmem:[#allocation3 + $0x80] sm:$0xff]
    %v577 = vld [vmem:[#allocation3 + $0x88] sm:$0xff]
    %v578 = vld [vmem:[#allocation3 + $0x90] sm:$0xff]
    %v579 = vld [vmem:[#allocation3 + $0x98] sm:$0xff]
    %v580 = vld [vmem:[#allocation3 + $0xa8] sm:$0x1]
    %v582 = vsel %vm61, %v53, 0
    %584 = vmatprep.subr.mxu0 0.0
    %585 = vmatpush1.msra.mxu0 %v576
    %586 = vmatprep.subr.mxu0 0.0
    %587 = vmatpush1.msra.mxu0 %v577
    %588 = vmatprep.subr.mxu0 0.0
    %589 = vmatpush1.msra.mxu0 %v578
    %590 = vmatprep.subr.mxu0 0.0
    %591 = vmatpush1.msra.mxu0 %v579
    %592 = vmatprep.subr.mxu0 0.0
    %593 = vmatpush1.msra.mxu0 0.0
    %594 = vmatprep.subr.mxu0 0.0
    %595 = vmatpush1.msra.mxu0 0.0
    %596 = vmatprep.subr.mxu0 0.0
    %597 = vmatpush1.msra.mxu0 0.0
    %598 = vmatprep.subr.mxu0 0.0
    %599 = vmatpush1.msra.mxu0 0.0
    %600 = vmatprep.subr.mxu0 0.0
    %601 = vmatpush1.msra.mxu0 0.0
    %602 = vmatprep.subr.mxu0 0.0
    %603 = vmatpush1.msra.mxu0 0.0
    %604 = vmatprep.subr.mxu0 0.0
    %605 = vmatpush1.msra.mxu0 0.0
    %606 = vmatprep.subr.mxu0 0.0
    %607 = vmatpush1.msra.mxu0 0.0
    %608 = vmatprep.subr.mxu0 0.0
    %609 = vmatpush1.msra.mxu0 0.0
    %610 = vmatprep.subr.mxu0 0.0
    %611 = vmatpush1.msra.mxu0 0.0
    %612 = vmatprep.subr.mxu0 0.0
    %613 = vmatpush1.msra.mxu0 0.0
    %614 = vmatprep.subr.mxu0 0.0
    %615 = vmatpush1.msra.mxu0 0.0
    %616 = vmatprep.subr.mxu0 0.0
    %617 = vmatpush1.msra.mxu0 0.0
    %618 = vmatprep.subr.mxu0 0.0
    %619 = vmatpush1.msra.mxu0 0.0
    %620 = vmatprep.subr.mxu0 0.0
    %621 = vmatpush1.msra.mxu0 0.0
    %622 = vmatprep.subr.mxu0 0.0
    %623 = vmatpush1.msra.mxu0 0.0
    %624 = vmatprep.subr.mxu0 0.0
    %625 = vmatpush1.msra.mxu0 0.0
    %626 = vmatprep.subr.mxu0 0.0
    %627 = vmatpush1.msra.mxu0 0.0
    %628 = vmatprep.subr.mxu0 0.0
    %629 = vmatpush1.msra.mxu0 0.0
    %630 = vmatprep.subr.mxu0 0.0
    %631 = vmatpush1.msra.mxu0 0.0
    %632 = vmatprep.subr.mxu0 0.0
    %633 = vmatpush1.msra.mxu0 0.0
    %634 = vmatprep.subr.mxu0 0.0
    %635 = vmatpush1.msra.mxu0 0.0
    %636 = vmatprep.subr.mxu0 0.0
    %637 = vmatpush1.msra.mxu0 0.0
    %638 = vmatprep.subr.mxu0 0.0
    %639 = vmatpush1.msra.mxu0 0.0
    %640 = vmatprep.subr.mxu0 0.0
    %641 = vmatpush1.msra.mxu0 0.0
    %642 = vmatprep.subr.mxu0 0.0
    %643 = vmatpush1.msra.mxu0 0.0
    %644 = vmatprep.subr.mxu0 0.0
    %645 = vmatpush1.msra.mxu0 0.0
    %646 = vmatprep.subr.mxu0 0.0
    %647 = vmatpush1.msra.mxu0 0.0
    %648 = vmatprep.mubr.f32.mxu0 0.0
    %649 = vmatmul.mubr.f32.gmra.mrb[0].mxu0 %v582
    %v650 = vpop.f32.mrb[0].mxu0
    %v651 = vadd.f32 0.0, %v650
    %v652 = vpop.f32.mrb[0].mxu0
    %653 = vdwg.mxu0
    %655 = vrot.lane.b32.xlu0 %v571, 32
    %v656 = vpop.permute.xlu0 %655
    %v657 = vsel %vm61, %v656, 0
    %659 = vmatprep.subr.mxu0 0.0
    %660 = vmatpush1.msra.mxu0 %v572
    %661 = vmatprep.subr.mxu0 0.0
    %662 = vmatpush1.msra.mxu0 %v573
    %663 = vmatprep.subr.mxu0 0.0
    %664 = vmatpush1.msra.mxu0 %v574
    %665 = vmatprep.subr.mxu0 0.0
    %666 = vmatpush1.msra.mxu0 %v575
    %667 = vmatprep.subr.mxu0 0.0
    %668 = vmatpush1.msra.mxu0 0.0
    %669 = vmatprep.subr.mxu0 0.0
    %670 = vmatpush1.msra.mxu0 0.0
    %671 = vmatprep.subr.mxu0 0.0
    %672 = vmatpush1.msra.mxu0 0.0
    %673 = vmatprep.subr.mxu0 0.0
    %674 = vmatpush1.msra.mxu0 0.0
    %675 = vmatprep.subr.mxu0 0.0
    %676 = vmatpush1.msra.mxu0 0.0
    %677 = vmatprep.subr.mxu0 0.0
    %678 = vmatpush1.msra.mxu0 0.0
    %679 = vmatprep.subr.mxu0 0.0
    %680 = vmatpush1.msra.mxu0 0.0
    %681 = vmatprep.subr.mxu0 0.0
    %682 = vmatpush1.msra.mxu0 0.0
    %683 = vmatprep.subr.mxu0 0.0
    %684 = vmatpush1.msra.mxu0 0.0
    %685 = vmatprep.subr.mxu0 0.0
    %686 = vmatpush1.msra.mxu0 0.0
    %687 = vmatprep.subr.mxu0 0.0
    %688 = vmatpush1.msra.mxu0 0.0
    %689 = vmatprep.subr.mxu0 0.0
    %690 = vmatpush1.msra.mxu0 0.0
    %691 = vmatprep.subr.mxu0 0.0
    %692 = vmatpush1.msra.mxu0 0.0
    %693 = vmatprep.subr.mxu0 0.0
    %694 = vmatpush1.msra.mxu0 0.0
    %695 = vmatprep.subr.mxu0 0.0
    %696 = vmatpush1.msra.mxu0 0.0
    %697 = vmatprep.subr.mxu0 0.0
    %698 = vmatpush1.msra.mxu0 0.0
    %699 = vmatprep.subr.mxu0 0.0
    %700 = vmatpush1.msra.mxu0 0.0
    %701 = vmatprep.subr.mxu0 0.0
    %702 = vmatpush1.msra.mxu0 0.0
    %703 = vmatprep.subr.mxu0 0.0
    %704 = vmatpush1.msra.mxu0 0.0
    %705 = vmatprep.subr.mxu0 0.0
    %706 = vmatpush1.msra.mxu0 0.0
    %707 = vmatprep.subr.mxu0 0.0
    %708 = vmatpush1.msra.mxu0 0.0
    %709 = vmatprep.subr.mxu0 0.0
    %710 = vmatpush1.msra.mxu0 0.0
    %711 = vmatprep.subr.mxu0 0.0
    %712 = vmatpush1.msra.mxu0 0.0
    %713 = vmatprep.subr.mxu0 0.0
    %714 = vmatpush1.msra.mxu0 0.0
    %715 = vmatprep.subr.mxu0 0.0
    %716 = vmatpush1.msra.mxu0 0.0
    %717 = vmatprep.subr.mxu0 0.0
    %718 = vmatpush1.msra.mxu0 0.0
    %719 = vmatprep.subr.mxu0 0.0
    %720 = vmatpush1.msra.mxu0 0.0
    %721 = vmatprep.subr.mxu0 0.0
    %722 = vmatpush1.msra.mxu0 0.0
    %723 = vmatprep.mubr.f32.mxu0 0.0
    %724 = vmatmul.mubr.f32.gmra.mrb[0].mxu0 %v657
    %v725 = vpop.f32.mrb[0].mxu0
    %v726 = vadd.f32 %v651, %v725
    %v727 = vpop.f32.mrb[0].mxu0
    %728 = vdwg.mxu0
    %v729 = vadd.f32 %v726, %v580
    %v730 = vxor.u32 %v729, 2147483648
    %v731 = vmul.f32 %v730, 1.442695
    %v732 = vpow.pop %v731
    %v733 = vadd.f32 %v732, 1.0
    %v734 = vrcp.pop %v733
    %v735 = vmul.f32 1.0, %v734
    %v736 = vtanh.pop %v729
    %738 = vrot.lane.b32.xlu0 %v55, 32
    %v739 = vpop.permute.xlu0 %738
    %v741 = vmul.f32 %v735, %v739
    %743 = vrot.lane.b32.xlu0 %v736, 64
    %v744 = vpop.permute.xlu0 %743
    %v746 = vmul.f32 %v735, %v744
    %748 = vrot.lane.b32.xlu0 %v746, 32
    %v749 = vpop.permute.xlu0 %748
    %v751 = vadd.f32 %v741, %v749
    %v752 = vtanh.pop %v751
    %754 = vrot.lane.b32.xlu0 %v752, 64
    %v755 = vpop.permute.xlu0 %754
    %v757 = vmul.f32 %v735, %v755
    %v758 = vld [vmem:[%s6] sm:$0xff]
    %v759 = vld [vmem:[%s6 + $0x8] sm:$0xff]
    %v760 = vld [vmem:[%s6 + $0x10] sm:$0xff]
    %v761 = vld [vmem:[%s6 + $0x18] sm:$0xff]
    %v762 = vld [vmem:[%s6 + $0x20] sm:$0x1]
    %764 = vrot.lane.b32.xlu0 %v757, 32
    %v765 = vpop.permute.xlu0 %764
    %v766 = vsel %vm61, %v765, 0
    %768 = vmatprep.subr.mxu0 0.0
    %769 = vmatpush1.msra.mxu0 %v758
    %770 = vmatprep.subr.mxu0 0.0
    %771 = vmatpush1.msra.mxu0 %v759
    %772 = vmatprep.subr.mxu0 0.0
    %773 = vmatpush1.msra.mxu0 %v760
    %774 = vmatprep.subr.mxu0 0.0
    %775 = vmatpush1.msra.mxu0 %v761
    %776 = vmatprep.subr.mxu0 0.0
    %777 = vmatpush1.msra.mxu0 0.0
    %778 = vmatprep.subr.mxu0 0.0
    %779 = vmatpush1.msra.mxu0 0.0
    %780 = vmatprep.subr.mxu0 0.0
    %781 = vmatpush1.msra.mxu0 0.0
    %782 = vmatprep.subr.mxu0 0.0
    %783 = vmatpush1.msra.mxu0 0.0
    %784 = vmatprep.subr.mxu0 0.0
    %785 = vmatpush1.msra.mxu0 0.0
    %786 = vmatprep.subr.mxu0 0.0
    %787 = vmatpush1.msra.mxu0 0.0
    %788 = vmatprep.subr.mxu0 0.0
    %789 = vmatpush1.msra.mxu0 0.0
    %790 = vmatprep.subr.mxu0 0.0
    %791 = vmatpush1.msra.mxu0 0.0
    %792 = vmatprep.subr.mxu0 0.0
    %793 = vmatpush1.msra.mxu0 0.0
    %794 = vmatprep.subr.mxu0 0.0
    %795 = vmatpush1.msra.mxu0 0.0
    %796 = vmatprep.subr.mxu0 0.0
    %797 = vmatpush1.msra.mxu0 0.0
    %798 = vmatprep.subr.mxu0 0.0
    %799 = vmatpush1.msra.mxu0 0.0
    %800 = vmatprep.subr.mxu0 0.0
    %801 = vmatpush1.msra.mxu0 0.0
    %802 = vmatprep.subr.mxu0 0.0
    %803 = vmatpush1.msra.mxu0 0.0
    %804 = vmatprep.subr.mxu0 0.0
    %805 = vmatpush1.msra.mxu0 0.0
    %806 = vmatprep.subr.mxu0 0.0
    %807 = vmatpush1.msra.mxu0 0.0
    %808 = vmatprep.subr.mxu0 0.0
    %809 = vmatpush1.msra.mxu0 0.0
    %810 = vmatprep.subr.mxu0 0.0
    %811 = vmatpush1.msra.mxu0 0.0
    %812 = vmatprep.subr.mxu0 0.0
    %813 = vmatpush1.msra.mxu0 0.0
    %814 = vmatprep.subr.mxu0 0.0
    %815 = vmatpush1.msra.mxu0 0.0
    %816 = vmatprep.subr.mxu0 0.0
    %817 = vmatpush1.msra.mxu0 0.0
    %818 = vmatprep.subr.mxu0 0.0
    %819 = vmatpush1.msra.mxu0 0.0
    %820 = vmatprep.subr.mxu0 0.0
    %821 = vmatpush1.msra.mxu0 0.0
    %822 = vmatprep.subr.mxu0 0.0
    %823 = vmatpush1.msra.mxu0 0.0
    %824 = vmatprep.subr.mxu0 0.0
    %825 = vmatpush1.msra.mxu0 0.0
    %826 = vmatprep.subr.mxu0 0.0
    %827 = vmatpush1.msra.mxu0 0.0
    %828 = vmatprep.subr.mxu0 0.0
    %829 = vmatpush1.msra.mxu0 0.0
    %830 = vmatprep.subr.mxu0 0.0
    %831 = vmatpush1.msra.mxu0 0.0
    %832 = vmatprep.mubr.f32.mxu0 0.0
    %833 = vmatmul.mubr.f32.gmra.mrb[0].mxu0 %v766
    %v834 = vpop.f32.mrb[0].mxu0
    %v835 = vadd.f32 %v762, %v834
    %v836 = vpop.f32.mrb[0].mxu0
    %837 = vdwg.mxu0
    %vm838 = vcmask 516096
    %v839 = vsel %vm838, %v835, -inf
    %840 = vmax.xlane.f32.xlu0 %v839
    %v841 = vpop.xlane.xlu0 %840
    %v842 = vsub.f32 %v835, %v841
    %v843 = vmul.f32 %v842, 1.442695
    %v844 = vpow.pop %v843
    %v845 = vsel %vm838, %v844, 0.0
    %846 = vadd.xlane.f32.xlu0 %v845
    %v847 = vpop.xlane.xlu0 %846
    %v848 = vlog2.pop %v847
    %v849 = vmul.f32 %v848, 0.6931472
    %v850 = vsub.f32 %v842, %v849
    %851 = vst.msk [vmem:[#allocation6] sm:$0x1] %vm838, %v850
    %852 = vst.msk [vmem:[#allocation9] sm:$0x1] %vm225, %v236
    %vm854 = vcmask 253952
    %855 = vst.msk [vmem:[#allocation7] sm:$0x1] %vm854, %v656
    %857 = vst.msk [vmem:[#allocation7 + $0x1] sm:$0x1] %vm854, %v765
    %859 = vrot.lane.b32.xlu0 %v565, 96
    %v860 = vpop.permute.xlu0 %859
    %862 = vst.msk [vmem:[#allocation7 + $0x2] sm:$0x1] %vm854, %v860
    %864 = vrot.lane.b32.xlu0 %v751, 96
    %v865 = vpop.permute.xlu0 %864
    %867 = vst.msk [vmem:[#allocation7 + $0x3] sm:$0x1] %vm854, %v865
    // Predicated region
    $region38: #{tpu_custom_call.1} parent=1 // pred_check
      _
    $region39: #{tpu_custom_call.1} parent=1 // pred_check_branch
      %869 = sbr.rel (0) target = $region41
    $region40: #{tpu_custom_call.1} parent=1 // pred_region
      %s871 = ssub.s32 16, 16
      %872 = vsyncadd [#allocation5], %s871
      %s874 = sshll.u32 [#allocation6], 4
      %s875 = int_to_ptr.vmem [resolvable:$true] %s874
      %877 = dma.vmem_to_hbm [thread:$0]  %s875, 16, %s8, [#allocation5]
    $region41: #{tpu_custom_call.1} parent=1 // pred_fallthru
      _
    // Predicated region
    $region42: #{tpu_custom_call.1} parent=1 // pred_check
      _
    $region43: #{tpu_custom_call.1} parent=1 // pred_check_branch
      %879 = sbr.rel (0) target = $region45
    $region44: #{tpu_custom_call.1} parent=1 // pred_region
      %s881 = ssub.s32 64, 64
      %882 = vsyncadd [#allocation8], %s881
      %s884 = sshll.u32 [#allocation7], 4
      %s885 = int_to_ptr.vmem [resolvable:$true] %s884
      %887 = dma.vmem_to_hbm [thread:$0]  %s885, 64, %s9, [#allocation8]
    $region45: #{tpu_custom_call.1} parent=1 // pred_fallthru
      _
    // Predicated region
    $region46: #{tpu_custom_call.1} parent=1 // pred_check
      _
    $region47: #{tpu_custom_call.1} parent=1 // pred_check_branch
      %889 = sbr.rel (0) target = $region49
    $region48: #{tpu_custom_call.1} parent=1 // pred_region
      %s891 = ssub.s32 16, 16
      %892 = vsyncadd [#allocation8], %s891
      %s894 = sshll.u32 [#allocation9], 4
      %s895 = int_to_ptr.vmem [resolvable:$true] %s894
      %897 = dma.vmem_to_hbm [thread:$0]  %s895, 16, %s10, [#allocation8]
    $region49: #{tpu_custom_call.1} parent=1 // pred_fallthru
      _
    // Predicated region
    $region50: #{tpu_custom_call.1} parent=1 // pred_check
      _
    $region51: #{tpu_custom_call.1} parent=1 // pred_check_branch
      %899 = sbr.rel (0) target = $region53
    $region52: #{tpu_custom_call.1} parent=1 // pred_region
      %900 = dma.done [#allocation5], 16
    $region53: #{tpu_custom_call.1} parent=1 // pred_fallthru
      _
    // Predicated region
    $region54: #{tpu_custom_call.1} parent=1 // pred_check
      _
    $region55: #{tpu_custom_call.1} parent=1 // pred_check_branch
      %902 = sbr.rel (0) target = $region57
    $region56: #{tpu_custom_call.1} parent=1 // pred_region
      %903 = dma.done [#allocation8], 64
    $region57: #{tpu_custom_call.1} parent=1 // pred_fallthru
      _
    // Predicated region
    $region58: #{tpu_custom_call.1} parent=1 // pred_check
      _
    $region59: #{tpu_custom_call.1} parent=1 // pred_check_branch
      %905 = sbr.rel (0) target = $region61
    $region60: #{tpu_custom_call.1} parent=1 // pred_region
      %906 = dma.done [#allocation8], 16
    $region61: #{tpu_custom_call.1} parent=1 // pred_fallthru
      _
    %907 = vsyncpa [#allocation4], 1
    %908 = vsyncpa [#allocation5], 1
    %909 = vsyncpa [#allocation8], 1

</llo_original>
